<compile_context>
chip_gen: v6e
topology: v6e:2x2x1
jax: 0.10.0
libtpu: 0.0.40
codegen_flags: <defaults>
</compile_context>

<pallas_src>
import functools

import jax
import jax.numpy as jnp
from jax import lax
from jax.experimental import pallas as pl
from jax.experimental.pallas import tpu as pltpu

# Explicit scoped-VMEM budget: above the v5e 16 MiB / v6e-v7x 32 MiB defaults,
# at or below physical VMEM on every generation, and far above the ~20 MiB
# footprint of these kernels at production sizes (C=1024, tn=1024).
_VMEM_LIMIT_BYTES = 64 * 1024 * 1024


def _round_up(x, m):
    return ((x + m - 1) // m) * m


def gram_kernel(x_ref, g_ref, acc_ref, *, compute_dtype, n_valid, tile_n,
                tiles_per_split, needs_mask):
    """Pass 1: accumulate G = X @ X^T in a fp32 VMEM scratch over N tiles and
    write the (C, C) result to HBM once, at the last tile of this split."""
    ti = pl.program_id(2)

    @pl.when(ti == 0)
    def _init():
        acc_ref[...] = jnp.zeros_like(acc_ref)

    xt = x_ref[0].astype(compute_dtype)                         # (C, tn)
    if needs_mask:
        # The last tile may extend past N: zero its out-of-range columns so
        # they contribute nothing to the Gram sum (replaces the wrapper pad).
        start = (pl.program_id(1) * tiles_per_split + ti) * tile_n
        col = lax.broadcasted_iota(jnp.int32, (1, tile_n), 1)
        xt = jnp.where(col < (n_valid - start), xt, jnp.zeros_like(xt))

    # Contract the lane (spatial) axis of both operands (no materialized
    # transpose); bf16 MXU operands, fp32 accumulation in the scratch.
    acc_ref[...] += lax.dot_general(xt, xt, (((1,), (1,)), ((), ())),
                                    preferred_element_type=jnp.float32)

    @pl.when(ti == pl.num_programs(2) - 1)
    def _finalize():
        g_ref[0, 0] = acc_ref[...]


def apply_kernel(m_ref, x_ref, o_ref, *, compute_dtype):
    """Pass 2: out_tile = X_tile + M @ X_tile (exact fp32 residual)."""
    xt = x_ref[0]                                               # (C, tn) fp32
    y = jnp.dot(m_ref[0], xt.astype(compute_dtype),             # M already in
                preferred_element_type=jnp.float32)             # compute dtype
    o_ref[0] = (xt + y).astype(o_ref.dtype)


@functools.partial(jax.jit,
                   static_argnames=("compute_dtype", "tile_n", "gram_splits"))
def glore_forward(x_nchw, params, *, compute_dtype=jnp.bfloat16, tile_n=1024,
                  gram_splits=0):
    """x_nchw: (b, C, h, w) float32; params: dict of GloRe weights."""
    b, C, h, w = x_nchw.shape
    N = h * w

    x_flat = x_nchw.reshape(b, C, N).astype(jnp.float32)        # free view

    # Lane-dense N tiling (multiple of 128); cdiv grid, no padding copy.
    tn = min(_round_up(tile_n, 128), _round_up(N, 128))
    n_tiles = -(-N // tn)
    needs_mask = (N % tn) != 0

    # Optional parallel split of the Gram reduction: on v7x (2 TensorCores) the
    # only parallel axis of pass 1 is b, so when b == 1 split N into `splits`
    # parallel partial-G accumulations and sum the tiny (splits, C, C) result.
    splits = gram_splits if gram_splits > 0 else (2 if b == 1 else 1)
    if splits > n_tiles or n_tiles % splits != 0:
        splits = 1
    tps = n_tiles // splits

    # ---- Pass 1: G = X X^T (fp32 scratch accumulator, single HBM write) -----
    g_partial = pl.pallas_call(
        functools.partial(gram_kernel, compute_dtype=compute_dtype, n_valid=N,
                          tile_n=tn, tiles_per_split=tps, needs_mask=needs_mask),
        out_shape=jax.ShapeDtypeStruct((b, splits, C, C), jnp.float32),
        grid=(b, splits, tps),
        in_specs=[pl.BlockSpec((1, C, tn),
                               lambda bi, s, ti: (bi, 0, s * tps + ti))],
        out_specs=pl.BlockSpec((1, 1, C, C), lambda bi, s, ti: (bi, s, 0, 0)),
        scratch_shapes=[pltpu.VMEM((C, C), jnp.float32)],
        compiler_params=pltpu.CompilerParams(
            dimension_semantics=("parallel", "parallel", "arbitrary"),
            vmem_limit_bytes=_VMEM_LIMIT_BYTES),
        cost_estimate=pl.CostEstimate(
            flops=2 * b * C * C * N, transcendentals=0,
            bytes_accessed=4 * b * C * N + 4 * b * splits * C * C),
    )(x_flat)

    g = g_partial[:, 0] if splits == 1 else jnp.sum(g_partial, axis=1)

    # ---- Tiny GCN chain on (C, C)/(C, C/4) matrices (plain XLA) -------------
    # bf16 MXU passes on the production path; HIGHEST on the fp32 debug path.
    prec = (lax.Precision.HIGHEST if compute_dtype == jnp.float32
            else lax.Precision.DEFAULT)
    wr = params["wr"].astype(jnp.float32)
    wp = params["wp"].astype(jnp.float32)
    w1 = params["w1"].astype(jnp.float32)
    w2 = params["w2"].astype(jnp.float32)
    we = params["we"].astype(jnp.float32)
    b1 = params["b1"].astype(jnp.float32)                       # (C, 1)
    b2 = params["b2"].astype(jnp.float32)                       # (Cq, 1)

    v = jnp.einsum("bcd,qd->bcq", g, wp, precision=prec)        # G @ Wp^T
    v = jnp.einsum("rc,bcq->brq", wr, v, precision=prec)        # Wr @ .
    v1 = jnp.einsum("oc,bcq->boq", w1, v, precision=prec) + b1[None]
    v2 = (jnp.einsum("oq,bcq->bco", w2, v1, precision=prec)
          + b2[:, 0][None, None, :])
    m = jnp.einsum("ic,bcq->biq", we, v2, precision=prec)       # We @ V2
    m = jnp.einsum("biq,qj->bij", m, wp, precision=prec)        # . @ Wp
    m = m.astype(compute_dtype)     # one-time cast; pass 2 uses it as-is

    # ---- Pass 2: out = X + M @ X, tiled over N (both axes parallel) ---------
    # Output stays fp32 to preserve the module's exact fp32 residual path.
    itemsize = jnp.dtype(compute_dtype).itemsize
    out = pl.pallas_call(
        functools.partial(apply_kernel, compute_dtype=compute_dtype),
        out_shape=jax.ShapeDtypeStruct((b, C, N), jnp.float32),
        grid=(b, n_tiles),
        in_specs=[pl.BlockSpec((1, C, C), lambda bi, ti: (bi, 0, 0)),   # M
                  pl.BlockSpec((1, C, tn), lambda bi, ti: (bi, 0, ti))],  # X
        out_specs=pl.BlockSpec((1, C, tn), lambda bi, ti: (bi, 0, ti)),
        compiler_params=pltpu.CompilerParams(
            dimension_semantics=("parallel", "parallel"),
            vmem_limit_bytes=_VMEM_LIMIT_BYTES),
        cost_estimate=pl.CostEstimate(
            flops=2 * b * C * C * N + b * C * N, transcendentals=0,
            bytes_accessed=8 * b * C * N + itemsize * b * C * C),
    )(m, x_flat)

    return out.reshape(b, C, h, w)


def glore_reference(x_nchw, params):
    """Pure-JAX reference mirroring the PyTorch forward exactly (fp32, highest
    matmul precision so it is a real ground truth)."""
    hp = jax.lax.Precision.HIGHEST
    b, C, h, w = x_nchw.shape
    N = h * w
    X = x_nchw.reshape(b, C, N)
    x_ = jnp.einsum("oc,bcn->bon", params["wr"], X, precision=hp)   # reduce_dim
    Bm = jnp.einsum("oc,bcn->bon", params["wp"], X, precision=hp)   # projection
    V = jnp.matmul(x_, jnp.swapaxes(Bm, 2, 1), precision=hp)        # (b, C, C/4)
    V1 = jnp.einsum("oc,bck->bok", params["w1"], V, precision=hp) + params["b1"][None]
    V2 = jnp.einsum("oc,bck->bok", params["w2"], jnp.swapaxes(V1, 2, 1),
                    precision=hp) + params["b2"][None]
    V2 = jnp.swapaxes(V2, 2, 1)                                     # (b, C, C/4)
    Y = jnp.matmul(V2, Bm, precision=hp)                            # (b, C, N)
    Y = jnp.einsum("oc,bcn->bon", params["we"], Y, precision=hp)    # expand_dim
    return (X + Y).reshape(b, C, h, w)


def make_params(key, C):
    Cq = C // 4
    ks = jax.random.split(key, 7)
    scale = 0.1
    return {
        "wr": scale * jax.random.normal(ks[0], (C, C), jnp.float32),
        "wp": scale * jax.random.normal(ks[1], (Cq, C), jnp.float32),
        "w1": scale * jax.random.normal(ks[2], (C, C), jnp.float32),
        "b1": scale * jax.random.normal(ks[3], (C, 1), jnp.float32),
        "w2": scale * jax.random.normal(ks[4], (Cq, Cq), jnp.float32),
        "b2": scale * jax.random.normal(ks[5], (Cq, 1), jnp.float32),
        "we": scale * jax.random.normal(ks[6], (C, C), jnp.float32),
    }


if __name__ == "__main__":
    key = jax.random.PRNGKey(0)
    k_x, k_p = jax.random.split(key)

    b, C, h, w = 2, 32, 16, 16          # channel must be divisible by 4
    x = jax.random.normal(k_x, (b, C, h, w), jnp.float32)
    params = make_params(k_p, C)

    ref = glore_reference(x, params)

    # Production path: bf16 MXU operands everywhere, fp32 accumulation.
    out_bf16 = jax.block_until_ready(
        glore_forward(x, params, compute_dtype=jnp.bfloat16))
    # Full-fp32 path (same kernels, HIGHEST-precision chain) for a tight check.
    out_f32 = jax.block_until_ready(
        glore_forward(x, params, compute_dtype=jnp.float32))

    assert out_bf16.shape == (b, C, h, w)
    assert out_f32.shape == (b, C, h, w)

    err_f32 = float(jnp.max(jnp.abs(out_f32 - ref)))
    err_bf16 = float(jnp.max(jnp.abs(out_bf16 - ref)))
    # fp32 path: only re-association / emulated-matmul rounding differences.
    assert err_f32 < 2e-2, f"fp32 kernel mismatch vs reference: {err_f32}"
    # bf16 operands through Gram (entries ~ h*w), the bf16 GCN chain and the
    # apply matmul: ~5e-2 absolute error expected at these magnitudes.
    assert err_bf16 < 1.5e-1, f"bf16 kernel mismatch vs reference: {err_bf16}"

    print("KERNEL_OK")
</pallas_src>

<mosaic_0001>
module attributes {stable_mosaic.version = 11 : i64} {
  func.func @gram_kernel(%arg0: i32, %arg1: i32, %arg2: i32, %arg3: memref<1x32x256xf32, #tpu.memory_space<vmem>>, %arg4: memref<1x1x32x32xf32, #tpu.memory_space<vmem>>, %arg5: memref<32x32xf32, #tpu.memory_space<vmem>>) attributes {dimension_semantics = [#tpu.dimension_semantics<parallel>, #tpu.dimension_semantics<parallel>, #tpu.dimension_semantics<arbitrary>], iteration_bounds = array<i64: 2, 1, 1>, scalar_prefetch = 0 : i64, scratch_operands = 1 : i64, tpu.core_type = #tpu.core_type<tc>, window_params = [{transform_indices = @transform_0, window_bounds = array<i64: 1, 32, 256>}, {transform_indices = @transform_1, window_bounds = array<i64: 1, 1, 32, 32>}]} {
    %c0_i32 = arith.constant 0 : i32
    %0 = arith.cmpi eq, %arg2, %c0_i32 : i32
    %1 = arith.extui %0 : i1 to i32
    %c0_i32_0 = arith.constant 0 : i32
    %2 = arith.cmpi ne, %1, %c0_i32_0 : i32
    scf.if %2 {
      %cst_9 = arith.constant 0.000000e+00 : f32
      %13 = vector.broadcast %cst_9 : f32 to vector<32x32xf32>
      %c0_10 = arith.constant 0 : index
      %c0_11 = arith.constant 0 : index
      %14 = vector.load %arg5[%c0_10, %c0_11] : memref<32x32xf32, #tpu.memory_space<vmem>>, vector<32x32xf32>
      tpu.vector_store %arg5[%c0_10, %c0_11], %13 {strides = array<i32>} : memref<32x32xf32, #tpu.memory_space<vmem>>, vector<32x32xf32>,
    } else {
    }
    %c0 = arith.constant 0 : index
    %c0_1 = arith.constant 0 : index
    %c0_2 = arith.constant 0 : index
    %3 = vector.load %arg3[%c0, %c0_1, %c0_2] : memref<1x32x256xf32, #tpu.memory_space<vmem>>, vector<1x32x256xf32>
    %4 = vector.shape_cast %3 : vector<1x32x256xf32> to vector<32x256xf32>
    %5 = arith.truncf %4 : vector<32x256xf32> to vector<32x256xbf16>
    %c0_3 = arith.constant 0 : index
    %c0_4 = arith.constant 0 : index
    %6 = vector.load %arg5[%c0_3, %c0_4] : memref<32x32xf32, #tpu.memory_space<vmem>>, vector<32x32xf32>
    %cst = arith.constant dense<0.000000e+00> : vector<32x32xf32>
    %7 = tpu.matmul %5, %5, %cst {dimension_numbers = #tpu.dot_dimension_numbers<[1], [1], [0], [0], [0, 0, 1, 0], [], []>} : vector<32x256xbf16>, vector<32x256xbf16>, vector<32x32xf32> -> vector<32x32xf32>
    %8 = arith.addf %6, %7 : vector<32x32xf32>
    %c0_5 = arith.constant 0 : index
    %c0_6 = arith.constant 0 : index
    %9 = vector.load %arg5[%c0_5, %c0_6] : memref<32x32xf32, #tpu.memory_space<vmem>>, vector<32x32xf32>
    tpu.vector_store %arg5[%c0_5, %c0_6], %8 {strides = array<i32>} : memref<32x32xf32, #tpu.memory_space<vmem>>, vector<32x32xf32>,
    %c0_i32_7 = arith.constant 0 : i32
    %10 = arith.cmpi eq, %arg2, %c0_i32_7 : i32
    %11 = arith.extui %10 : i1 to i32
    %c0_i32_8 = arith.constant 0 : i32
    %12 = arith.cmpi ne, %11, %c0_i32_8 : i32
    scf.if %12 {
      %c0_9 = arith.constant 0 : index
      %c0_10 = arith.constant 0 : index
      %13 = vector.load %arg5[%c0_9, %c0_10] : memref<32x32xf32, #tpu.memory_space<vmem>>, vector<32x32xf32>
      %c0_11 = arith.constant 0 : index
      %c0_12 = arith.constant 0 : index
      %c0_13 = arith.constant 0 : index
      %c0_14 = arith.constant 0 : index
      %14 = vector.load %arg4[%c0_11, %c0_12, %c0_13, %c0_14] : memref<1x1x32x32xf32, #tpu.memory_space<vmem>>, vector<1x1x32x32xf32>
      %15 = vector.shape_cast %14 : vector<1x1x32x32xf32> to vector<32x32xf32>
      %16 = vector.shape_cast %13 : vector<32x32xf32> to vector<1x1x32x32xf32>
      tpu.vector_store %arg4[%c0_11, %c0_12, %c0_13, %c0_14], %16 {strides = array<i32>} : memref<1x1x32x32xf32, #tpu.memory_space<vmem>>, vector<1x1x32x32xf32>,
    } else {
    }
    return
  }
  func.func @transform_0(%arg0: i32, %arg1: i32, %arg2: i32) -> (i32, i32, i32) {
    %c1_i32 = arith.constant 1 : i32
    %0 = arith.muli %arg1, %c1_i32 : i32
    %1 = arith.addi %0, %arg2 : i32
    %c0_i32 = arith.constant 0 : i32
    %c0_i32_0 = arith.constant 0 : i32
    return %arg0, %c0_i32, %1 : i32, i32, i32
  }
  func.func @transform_1(%arg0: i32, %arg1: i32, %arg2: i32) -> (i32, i32, i32, i32) {
    %c0_i32 = arith.constant 0 : i32
    %c0_i32_0 = arith.constant 0 : i32
    %c0_i32_1 = arith.constant 0 : i32
    return %arg0, %arg1, %c0_i32, %c0_i32_0 : i32, i32, i32, i32
  }
}

module attributes {stable_mosaic.version = 11 : i64} {
  func.func @apply_kernel(%arg0: i32, %arg1: i32, %arg2: memref<1x32x32xbf16, #tpu.memory_space<vmem>>, %arg3: memref<1x32x256xf32, #tpu.memory_space<vmem>>, %arg4: memref<1x32x256xf32, #tpu.memory_space<vmem>>) attributes {dimension_semantics = [#tpu.dimension_semantics<parallel>, #tpu.dimension_semantics<parallel>], iteration_bounds = array<i64: 2, 1>, scalar_prefetch = 0 : i64, scratch_operands = 0 : i64, tpu.core_type = #tpu.core_type<tc>, window_params = [{transform_indices = @transform_0, window_bounds = array<i64: 1, 32, 32>}, {transform_indices = @transform_1, window_bounds = array<i64: 1, 32, 256>}, {transform_indices = @transform_2, window_bounds = array<i64: 1, 32, 256>}]} {
    %c0 = arith.constant 0 : index
    %c0_0 = arith.constant 0 : index
    %c0_1 = arith.constant 0 : index
    %0 = vector.load %arg3[%c0, %c0_0, %c0_1] : memref<1x32x256xf32, #tpu.memory_space<vmem>>, vector<1x32x256xf32>
    %1 = vector.shape_cast %0 : vector<1x32x256xf32> to vector<32x256xf32>
    %c0_2 = arith.constant 0 : index
    %c0_3 = arith.constant 0 : index
    %c0_4 = arith.constant 0 : index
    %2 = vector.load %arg2[%c0_2, %c0_3, %c0_4] : memref<1x32x32xbf16, #tpu.memory_space<vmem>>, vector<1x32x32xbf16>
    %3 = vector.shape_cast %2 : vector<1x32x32xbf16> to vector<32x32xbf16>
    %4 = arith.truncf %1 : vector<32x256xf32> to vector<32x256xbf16>
    %cst = arith.constant dense<0.000000e+00> : vector<32x256xf32>
    %5 = tpu.matmul %3, %4, %cst {dimension_numbers = #tpu.dot_dimension_numbers<[1], [0], [0], [1], [0, 0, 1, 1], [], []>} : vector<32x32xbf16>, vector<32x256xbf16>, vector<32x256xf32> -> vector<32x256xf32>
    %6 = arith.addf %1, %5 : vector<32x256xf32>
    %c0_5 = arith.constant 0 : index
    %c0_6 = arith.constant 0 : index
    %c0_7 = arith.constant 0 : index
    %7 = vector.load %arg4[%c0_5, %c0_6, %c0_7] : memref<1x32x256xf32, #tpu.memory_space<vmem>>, vector<1x32x256xf32>
    %8 = vector.shape_cast %7 : vector<1x32x256xf32> to vector<32x256xf32>
    %9 = vector.shape_cast %6 : vector<32x256xf32> to vector<1x32x256xf32>
    tpu.vector_store %arg4[%c0_5, %c0_6, %c0_7], %9 {strides = array<i32>} : memref<1x32x256xf32, #tpu.memory_space<vmem>>, vector<1x32x256xf32>,
    return
  }
  func.func @transform_0(%arg0: i32, %arg1: i32) -> (i32, i32, i32) {
    %c0_i32 = arith.constant 0 : i32
    %c0_i32_0 = arith.constant 0 : i32
    %c0_i32_1 = arith.constant 0 : i32
    return %arg0, %c0_i32, %c0_i32_0 : i32, i32, i32
  }
  func.func @transform_1(%arg0: i32, %arg1: i32) -> (i32, i32, i32) {
    %c0_i32 = arith.constant 0 : i32
    %c0_i32_0 = arith.constant 0 : i32
    return %arg0, %c0_i32, %arg1 : i32, i32, i32
  }
  func.func @transform_2(%arg0: i32, %arg1: i32) -> (i32, i32, i32) {
    %c0_i32 = arith.constant 0 : i32
    %c0_i32_0 = arith.constant 0 : i32
    return %arg0, %c0_i32, %arg1 : i32, i32, i32
  }
}

</mosaic_0001>

<llo_original>
// kernel: glore_forward.2
$region0: #{glore_forward.2}
  #allocation0 [shape = 'u32[]', space=smem, size = 0x4, offset = 0x4, fixed_abs, tag = 'smem constant byte address 0x4 - core index']
  #allocation1 [shape = 'u32[144,128]{1,0:T(1,128)}', space=vmem, size = 0x12000, scoped, tag = 'internal scratch']
  #allocation2 [shape = 'f32[32,32]{1,0:T(8,128)}', space=vmem, size = 0x4000, scoped, tag = 'scratch operand']
  %s0 = inlined_call_operand.vmem [shape: f32[2,32,256], index: 0, kind: input, shape index: {}]
  %s1 = inlined_call_operand.vmem [shape: f32[2,1,32,32], index: 1, kind: output, shape index: {}]
  %s2 = sld [smem:[#allocation0]]
  $region45: #{glore_forward.2} parent=0
    _
  %s4 = ssub.s32 1, %s2
  %s5 = scalar_select 0, %s4, %s2
  loop: start=0, step=1, limit=4
  $region2: #{glore_forward.2} parent=0 // loop_pre_header
    _
  $region3: #{glore_forward.2} parent=0 // loop_header
    %s7 = sphi 0, %s11
    %p8 = scmp.ge.s32.totalorder %s7, 4
    %s14 = sphi 0, %s33
    %s15 = sphi 0, %s29
    %s16 = sphi 0, %s25
    %s17 = sphi 0, %s14
    %s18 = sphi 0, %s15
    %s19 = sphi 0, %s16
    %s20 = sphi 0, %s17
    %s21 = sphi 0, %s18
    %s22 = sphi 0, %s19
    %s40 = sphi 0, %s42
    %s43 = sphi 0, %s40
    %s44 = sphi 0, %s43
    %s60 = sphi 0, %s44
    %s68 = sphi 0, %s70
    %s71 = sphi 0, %s68
    %s72 = sphi 0, %s71
    %s88 = sphi 0, %s72
  $region4: #{glore_forward.2} parent=0 // loop_header_branch
    %10 = sbr.rel (%p8) target = $region8
  $region5: #{glore_forward.2} parent=0 // loop_body
    %s12 = ssub.s32 %s7, 1
    %s13 = ssub.s32 %s7, 2
    %s23 = sadd.s32 1, %s16
    %p24 = scmp.ge.s32.totalorder %s23, 1
    %s25 = scalar_select %p24, 0, %s23
    %s26 = sadd.s32 1, %s15
    %s27 = scalar_select %p24, %s26, %s15
    %p28 = scmp.ge.s32.totalorder %s27, 1
    %s29 = scalar_select %p28, 0, %s27
    %s30 = sadd.s32 1, %s14
    %s31 = scalar_select %p28, %s30, %s14
    %p32 = scmp.ge.s32.totalorder %s31, 2
    %s33 = scalar_select %p32, 0, %s31
    %s34 = sadd.s32 %s15, %s16
    %s35 = sadd.s32 %s29, %s25
    %s36 = ssub.s32 %s14, %s33
    %s37 = ssub.s32 %s34, %s35
    %s38 = sor.u32 %s36, %s37
    %p39 = scmp.eq.s32.totalorder %s38, 0
    %s41 = sadd.s32 %s40, 1
    %s42 = scalar_select %p39, %s40, %s41
    %p45 = pneg %p39
    %p46 = scmp.eq.s32.totalorder %s7, 1
    %p47 = por %p45, %p46
    %p48 = scmp.ne.s32.totalorder %s40, %s43
    %p49 = scmp.eq.s32.totalorder %s7, 0
    %p50 = por %p48, %p49
    %p51 = scmp.ne.s32.totalorder %s40, %s43
    %p52 = scmp.eq.s32.totalorder %s12, 1
    %p53 = por %p51, %p52
    %p54 = scmp.ne.s32.totalorder %s43, %s44
    %p55 = scmp.eq.s32.totalorder %s12, 0
    %p56 = por %p54, %p55
    %p57 = scmp.ne.s32.totalorder %s43, %s44
    %p58 = scmp.eq.s32.totalorder %s13, 1
    %p59 = por %p57, %p58
    %p61 = scmp.ne.s32.totalorder %s44, %s60
    %p62 = scmp.eq.s32.totalorder %s13, 0
    %p63 = por %p61, %p62
    %s64 = ssub.s32 %s14, %s33
    %s65 = ssub.s32 %s15, %s29
    %s66 = sor.u32 %s64, %s65
    %p67 = scmp.eq.s32.totalorder %s66, 0
    %s69 = sadd.s32 %s68, 1
    %s70 = scalar_select %p67, %s68, %s69
    %p73 = pneg %p67
    %p74 = scmp.eq.s32.totalorder %s7, 1
    %p75 = por %p73, %p74
    %p76 = scmp.ne.s32.totalorder %s68, %s71
    %p77 = scmp.eq.s32.totalorder %s7, 0
    %p78 = por %p76, %p77
    %p79 = scmp.ne.s32.totalorder %s68, %s71
    %p80 = scmp.eq.s32.totalorder %s12, 1
    %p81 = por %p79, %p80
    %p82 = scmp.ne.s32.totalorder %s71, %s72
    %p83 = scmp.eq.s32.totalorder %s12, 0
    %p84 = por %p82, %p83
    %p85 = scmp.ne.s32.totalorder %s71, %s72
    %p86 = scmp.eq.s32.totalorder %s13, 1
    %p87 = por %p85, %p86
    %p89 = scmp.ne.s32.totalorder %s72, %s88
    %p90 = scmp.eq.s32.totalorder %s13, 0
    %p91 = por %p89, %p90
    %p92 = scmp.le.s32.totalorder 1, %s7
    %p93 = scmp.lt.s32.totalorder %s7, 3
    %p94 = pnand %p92, %p93
    %p95 = pneg %p94
    // Predicated region
    $region9: #{glore_forward.2} parent=5 // pred_check
      _
    $region10: #{glore_forward.2} parent=5 // pred_check_branch
      %97 = sbr.rel (%p94) target = $region12
    $region11: #{glore_forward.2} parent=5 // pred_region
      %s98 = ssub.s32 %s7, 1
    $region12: #{glore_forward.2} parent=5 // pred_fallthru
      _
    %p99 = scmp.lt.s32.totalorder %s7, 2
    // Predicated region
    $region13: #{glore_forward.2} parent=5 // pred_check
      %p100 = pneg %p99
    $region14: #{glore_forward.2} parent=5 // pred_check_branch
      %102 = sbr.rel (%p100) target = $region16
    $region15: #{glore_forward.2} parent=5 // pred_region
      // Predicated region
      $region17: #{glore_forward.2} parent=15 // pred_check
        %p103 = pneg %p50
      $region18: #{glore_forward.2} parent=15 // pred_check_branch
        %105 = sbr.rel (%p103) target = $region20
      $region19: #{glore_forward.2} parent=15 // pred_region
        %s106 = sadd.s32 %s15, %s16
        %s107 = smul.u32 2, %s106
        %p108 = scmp.lt.s32.totalorder %s14, 1
        %s109 = scalar_select %p108, %s14, 1
        %p110 = scmp.lt.s32.totalorder %s107, 1
        %s111 = scalar_select %p110, %s107, 1
        %s112 = smul.addr %s109, 8
        %s113 = sadd.s32 %s111, %s112
        %s114 = smul.addr %s113, 8
        %s115 = scalar_lea.vmem %s0, %s114
        %s116 = sadd.s32 %s15, %s16
        %s117 = smul.u32 2, %s116
      $region20: #{glore_forward.2} parent=15 // pred_fallthru
        _
    $region16: #{glore_forward.2} parent=5 // pred_fallthru
      _
    %p118 = scmp.le.s32.totalorder 1, %s7
    %p119 = scmp.lt.s32.totalorder %s7, 3
    %p120 = pnand %p118, %p119
    %p121 = pneg %p120
    // Predicated region
    $region21: #{glore_forward.2} parent=5 // pred_check
      _
    $region22: #{glore_forward.2} parent=5 // pred_check_branch
      %123 = sbr.rel (%p120) target = $region24
    $region23: #{glore_forward.2} parent=5 // pred_region
      %s124 = ssub.s32 %s7, 1
      %s125 = sadd.s32 %s18, %s19
      %s126 = smul.u32 2, %s125
      %p127 = scmp.lt.s32.totalorder %s17, 1
      %s128 = scalar_select %p127, %s17, 1
      %p129 = scmp.lt.s32.totalorder %s126, 1
      %s130 = scalar_select %p129, %s126, 1
      %s131 = smul.addr %s128, 8
      %s132 = sadd.s32 %s130, %s131
      %s133 = smul.addr %s132, 8
      %s134 = scalar_lea.vmem %s0, %s133
      %p135 = pneg %p56
      %p136 = pneg %p53
      %p137 = pneg %p84
      %p138 = pneg %p81
      %p139 = scmp.lt.s32.totalorder %s17, 1
      %s140 = scalar_select %p139, %s17, 1
      %p141 = scmp.lt.s32.totalorder %s18, 0
      %s142 = scalar_select %p141, %s18, 0
      %s143 = smul.addr %s142, 4
      %s144 = smul.addr %s140, 4
      %s145 = sadd.s32 %s143, %s144
      %s146 = smul.addr %s145, 8
      %s147 = scalar_lea.vmem %s1, %s146
      %s148 = sadd.s32 %s18, %s19
      %s149 = smul.u32 2, %s148
      %p150 = scmp.lt.s32.totalorder %s17, 1
      %s151 = scalar_select %p150, %s17, 1
      %p152 = scmp.lt.s32.totalorder %s149, 1
      %s153 = scalar_select %p152, %s149, 1
      %s154 = smul.addr %s151, 8
      %s155 = sadd.s32 %s153, %s154
      %s156 = smul.addr %s155, 8
      %s157 = scalar_lea.vmem %s0, %s156
      %s158 = sadd.s32 %s18, %s19
      %s159 = smul.u32 2, %s158
      %p160 = scmp.lt.s32.totalorder %s17, 1
      %s161 = scalar_select %p160, %s17, 1
      %p162 = scmp.lt.s32.totalorder %s18, 0
      %s163 = scalar_select %p162, %s18, 0
      %s164 = smul.addr %s163, 4
      %s165 = smul.addr %s161, 4
      %s166 = sadd.s32 %s164, %s165
      %s167 = smul.addr %s166, 8
      %s168 = scalar_lea.vmem %s1, %s167
      %p170 = scmp.eq.s32.totalorder %s19, 0
      // Predicated region
      $region25: #{glore_forward.2} parent=23 // pred_check
        %p171 = pneg %p170
      $region26: #{glore_forward.2} parent=23 // pred_check_branch
        %173 = sbr.rel (%p171) target = $region28
      $region27: #{glore_forward.2} parent=23 // pred_region
        %vm174 = vcmask 261120
        %175 = vst.msk [vmem:[#allocation2] sm:$0xff] %vm174, 0.0
        %176 = vst.msk [vmem:[#allocation2 + $0x8] sm:$0xff] %vm174, 0.0
        %177 = vst.msk [vmem:[#allocation2 + $0x10] sm:$0xff] %vm174, 0.0
        %178 = vst.msk [vmem:[#allocation2 + $0x18] sm:$0xff] %vm174, 0.0
      $region28: #{glore_forward.2} parent=23 // pred_fallthru
        _
      %v179 = vld [vmem:[%s157] sm:$0xff]
      %v180 = vld [vmem:[%s157 + $0x8] sm:$0xff]
      %v181 = vld [vmem:[%s157 + $0x10] sm:$0xff]
      %v182 = vld [vmem:[%s157 + $0x18] sm:$0xff]
      %v183 = vld [vmem:[%s157 + $0x20] sm:$0xff]
      %v184 = vld [vmem:[%s157 + $0x28] sm:$0xff]
      %v185 = vld [vmem:[%s157 + $0x30] sm:$0xff]
      %v186 = vld [vmem:[%s157 + $0x38] sm:$0xff]
      %v187 = vpack.c.bf16 %v181, %v179
      %v188 = vpack.c.bf16 %v182, %v180
      %v189 = vpack.c.bf16 %v185, %v183
      %v190 = vpack.c.bf16 %v186, %v184
      %v191 = vld [vmem:[#allocation2] sm:$0xff]
      %v192 = vld [vmem:[#allocation2 + $0x8] sm:$0xff]
      %v193 = vld [vmem:[#allocation2 + $0x10] sm:$0xff]
      %v194 = vld [vmem:[#allocation2 + $0x18] sm:$0xff]
      %195 = vmatprep.subr.bf16.mxu0 0
      %196 = vmatpush1.bf16.xpose.msra.mxu0 0
      %197 = vmatprep.subr.bf16.mxu0 0
      %198 = vmatpush1.bf16.xpose.msra.mxu0 0
      %199 = vmatprep.subr.bf16.mxu0 0
      %200 = vmatpush1.bf16.xpose.msra.mxu0 0
      %201 = vmatprep.subr.bf16.mxu0 0
      %202 = vmatpush1.bf16.xpose.msra.mxu0 0
      %203 = vmatprep.subr.bf16.mxu0 0
      %204 = vmatpush1.bf16.xpose.msra.mxu0 0
      %205 = vmatprep.subr.bf16.mxu0 0
      %206 = vmatpush1.bf16.xpose.msra.mxu0 0
      %207 = vmatprep.subr.bf16.mxu0 %v190
      %208 = vmatpush1.bf16.xpose.msra.mxu0 %v189
      %209 = vmatprep.subr.bf16.mxu0 %v188
      %210 = vmatpush1.bf16.xpose.msra.mxu0 %v187
      %211 = vmatprep.subr.bf16.mxu0 0
      %212 = vmatpush2.bf16.xpose.msra.mxu0 0
      %213 = vmatprep.subr.bf16.mxu0 0
      %214 = vmatpush2.bf16.xpose.msra.mxu0 0
      %215 = vmatprep.subr.bf16.mxu0 0
      %216 = vmatpush2.bf16.xpose.msra.mxu0 0
      %217 = vmatprep.subr.bf16.mxu0 0
      %218 = vmatpush2.bf16.xpose.msra.mxu0 0
      %219 = vmatprep.subr.bf16.mxu0 0
      %220 = vmatpush2.bf16.xpose.msra.mxu0 0
      %221 = vmatprep.subr.bf16.mxu0 0
      %222 = vmatpush2.bf16.xpose.msra.mxu0 0
      %223 = vmatprep.subr.bf16.mxu0 0
      %224 = vmatpush2.bf16.xpose.msra.mxu0 0
      %225 = vmatprep.subr.bf16.mxu0 0
      %226 = vmatpush2.bf16.xpose.msra.mxu0 0
      %227 = vmatprep.mubr.bf16.mxu0 %v188
      %228 = vmatmul.mubr.bf16.gmra.mxu0 %v187
      %v229 = vpop.f32.mrf.mxu0
      %v230 = vadd.f32 0.0, %v229
      %v231 = vpop.f32.mrf.mxu0
      %v232 = vpop.f32.mrf.mxu0
      %v233 = vadd.f32 0.0, %v232
      %v234 = vpop.f32.mrf.mxu0
      %235 = vmatprep.mubr.bf16.mxu0 %v190
      %236 = vmatmul.mubr.bf16.gmra.mxu0 %v189
      %v237 = vpop.f32.mrf.mxu0
      %v238 = vadd.f32 0.0, %v237
      %v239 = vpop.f32.mrf.mxu0
      %v240 = vpop.f32.mrf.mxu0
      %v241 = vadd.f32 0.0, %v240
      %v242 = vpop.f32.mrf.mxu0
      %243 = vdwg.mxu0
      %v244 = vadd.f32 %v191, %v230
      %v245 = vadd.f32 %v192, %v233
      %v246 = vadd.f32 %v193, %v238
      %v247 = vadd.f32 %v194, %v241
      %vm248 = vcmask 261120
      %249 = vst.msk [vmem:[#allocation2] sm:$0xff] %vm248, %v244
      %250 = vst.msk [vmem:[#allocation2 + $0x8] sm:$0xff] %vm248, %v245
      %251 = vst.msk [vmem:[#allocation2 + $0x10] sm:$0xff] %vm248, %v246
      %252 = vst.msk [vmem:[#allocation2 + $0x18] sm:$0xff] %vm248, %v247
      // Predicated region
      $region29: #{glore_forward.2} parent=23 // pred_check
        %p253 = pneg %p170
      $region30: #{glore_forward.2} parent=23 // pred_check_branch
        %255 = sbr.rel (%p253) target = $region32
      $region31: #{glore_forward.2} parent=23 // pred_region
        %v256 = vld [vmem:[#allocation2] sm:$0xff]
        %v257 = vld [vmem:[#allocation2 + $0x8] sm:$0xff]
        %v258 = vld [vmem:[#allocation2 + $0x10] sm:$0xff]
        %v259 = vld [vmem:[#allocation2 + $0x18] sm:$0xff]
        %260 = vst.msk [vmem:[%s168] sm:$0xff] %vm248, %v256
        %261 = vst.msk [vmem:[%s168 + $0x8] sm:$0xff] %vm248, %v257
        %262 = vst.msk [vmem:[%s168 + $0x10] sm:$0xff] %vm248, %v258
        %263 = vst.msk [vmem:[%s168 + $0x18] sm:$0xff] %vm248, %v259
      $region32: #{glore_forward.2} parent=23 // pred_fallthru
        _
      %p264 = scmp.lt.s32.totalorder %s17, 1
      %s265 = scalar_select %p264, %s17, 1
      %p266 = scmp.lt.s32.totalorder %s18, 0
      %s267 = scalar_select %p266, %s18, 0
      %s268 = smul.addr %s267, 4
      %s269 = smul.addr %s265, 4
      %s270 = sadd.s32 %s268, %s269
      %s271 = smul.addr %s270, 8
      %s272 = scalar_lea.vmem %s1, %s271
      // Predicated region
      $region33: #{glore_forward.2} parent=23 // pred_check
        %p273 = pneg %p81
      $region34: #{glore_forward.2} parent=23 // pred_check_branch
        %275 = sbr.rel (%p273) target = $region36
      $region35: #{glore_forward.2} parent=23 // pred_region
        _
      $region36: #{glore_forward.2} parent=23 // pred_fallthru
        _
    $region24: #{glore_forward.2} parent=5 // pred_fallthru
      _
    %p276 = scmp.le.s32.totalorder 2, %s7
    // Predicated region
    $region37: #{glore_forward.2} parent=5 // pred_check
      %p277 = pneg %p276
    $region38: #{glore_forward.2} parent=5 // pred_check_branch
      %279 = sbr.rel (%p277) target = $region40
    $region39: #{glore_forward.2} parent=5 // pred_region
      %s280 = ssub.s32 %s7, 2
      // Predicated region
      $region41: #{glore_forward.2} parent=39 // pred_check
        %p281 = pneg %p87
      $region42: #{glore_forward.2} parent=39 // pred_check_branch
        %283 = sbr.rel (%p281) target = $region44
      $region43: #{glore_forward.2} parent=39 // pred_region
        %p284 = scmp.lt.s32.totalorder %s20, 1
        %s285 = scalar_select %p284, %s20, 1
        %p286 = scmp.lt.s32.totalorder %s21, 0
        %s287 = scalar_select %p286, %s21, 0
        %s288 = smul.addr %s287, 4
        %s289 = smul.addr %s285, 4
        %s290 = sadd.s32 %s288, %s289
        %s291 = smul.addr %s290, 8
        %s292 = scalar_lea.vmem %s1, %s291
      $region44: #{glore_forward.2} parent=39 // pred_fallthru
        _
    $region40: #{glore_forward.2} parent=5 // pred_fallthru
      _
  $region6: #{glore_forward.2} parent=0 // loop_footer
    %s11 = sadd.s32 1, %s7
  $region7: #{glore_forward.2} parent=0 // loop_footer_branch
    %6 = sbr.rel target = $region3
  $region8: #{glore_forward.2} parent=0 // loop_exit
    _

// kernel: glore_forward.3
$region0: #{glore_forward.3}
  #allocation0 [shape = 'u32[]', space=smem, size = 0x4, offset = 0x4, fixed_abs, tag = 'smem constant byte address 0x4 - core index']
  #allocation1 [shape = 'u32[144,128]{1,0:T(1,128)}', space=vmem, size = 0x12000, scoped, tag = 'internal scratch']
  %s0 = inlined_call_operand.vmem [shape: bf16[2,32,32], index: 0, kind: input, shape index: {}]
  %s1 = inlined_call_operand.vmem [shape: f32[2,32,256], index: 1, kind: input, shape index: {}]
  %s2 = inlined_call_operand.vmem [shape: f32[2,32,256], index: 2, kind: output, shape index: {}]
  %s3 = sld [smem:[#allocation0]]
  $region41: #{glore_forward.3} parent=0
    _
  %s5 = ssub.s32 1, %s3
  %s6 = scalar_select 0, %s5, %s3
  loop: start=0, step=1, limit=4
  $region2: #{glore_forward.3} parent=0 // loop_pre_header
    _
  $region3: #{glore_forward.3} parent=0 // loop_header
    %s8 = sphi 0, %s12
    %p9 = scmp.ge.s32.totalorder %s8, 4
    %s15 = sphi 0, %s27
    %s16 = sphi 0, %s23
    %s17 = sphi 0, %s15
    %s18 = sphi 0, %s16
    %s19 = sphi 0, %s17
    %s20 = sphi 0, %s18
    %s30 = sphi 0, %s32
    %s33 = sphi 0, %s30
    %s34 = sphi 0, %s33
    %s50 = sphi 0, %s34
    %s58 = sphi 0, %s60
    %s61 = sphi 0, %s58
    %s62 = sphi 0, %s61
    %s78 = sphi 0, %s62
    %s86 = sphi 0, %s88
    %s89 = sphi 0, %s86
    %s90 = sphi 0, %s89
    %s106 = sphi 0, %s90
  $region4: #{glore_forward.3} parent=0 // loop_header_branch
    %11 = sbr.rel (%p9) target = $region8
  $region5: #{glore_forward.3} parent=0 // loop_body
    %s13 = ssub.s32 %s8, 1
    %s14 = ssub.s32 %s8, 2
    %s21 = sadd.s32 1, %s16
    %p22 = scmp.ge.s32.totalorder %s21, 1
    %s23 = scalar_select %p22, 0, %s21
    %s24 = sadd.s32 1, %s15
    %s25 = scalar_select %p22, %s24, %s15
    %p26 = scmp.ge.s32.totalorder %s25, 2
    %s27 = scalar_select %p26, 0, %s25
    %s28 = ssub.s32 %s15, %s27
    %p29 = scmp.eq.s32.totalorder %s28, 0
    %s31 = sadd.s32 %s30, 1
    %s32 = scalar_select %p29, %s30, %s31
    %p35 = pneg %p29
    %p36 = scmp.eq.s32.totalorder %s8, 1
    %p37 = por %p35, %p36
    %p38 = scmp.ne.s32.totalorder %s30, %s33
    %p39 = scmp.eq.s32.totalorder %s8, 0
    %p40 = por %p38, %p39
    %p41 = scmp.ne.s32.totalorder %s30, %s33
    %p42 = scmp.eq.s32.totalorder %s13, 1
    %p43 = por %p41, %p42
    %p44 = scmp.ne.s32.totalorder %s33, %s34
    %p45 = scmp.eq.s32.totalorder %s13, 0
    %p46 = por %p44, %p45
    %p47 = scmp.ne.s32.totalorder %s33, %s34
    %p48 = scmp.eq.s32.totalorder %s14, 1
    %p49 = por %p47, %p48
    %p51 = scmp.ne.s32.totalorder %s34, %s50
    %p52 = scmp.eq.s32.totalorder %s14, 0
    %p53 = por %p51, %p52
    %s54 = ssub.s32 %s15, %s27
    %s55 = ssub.s32 %s16, %s23
    %s56 = sor.u32 %s54, %s55
    %p57 = scmp.eq.s32.totalorder %s56, 0
    %s59 = sadd.s32 %s58, 1
    %s60 = scalar_select %p57, %s58, %s59
    %p63 = pneg %p57
    %p64 = scmp.eq.s32.totalorder %s8, 1
    %p65 = por %p63, %p64
    %p66 = scmp.ne.s32.totalorder %s58, %s61
    %p67 = scmp.eq.s32.totalorder %s8, 0
    %p68 = por %p66, %p67
    %p69 = scmp.ne.s32.totalorder %s58, %s61
    %p70 = scmp.eq.s32.totalorder %s13, 1
    %p71 = por %p69, %p70
    %p72 = scmp.ne.s32.totalorder %s61, %s62
    %p73 = scmp.eq.s32.totalorder %s13, 0
    %p74 = por %p72, %p73
    %p75 = scmp.ne.s32.totalorder %s61, %s62
    %p76 = scmp.eq.s32.totalorder %s14, 1
    %p77 = por %p75, %p76
    %p79 = scmp.ne.s32.totalorder %s62, %s78
    %p80 = scmp.eq.s32.totalorder %s14, 0
    %p81 = por %p79, %p80
    %s82 = ssub.s32 %s15, %s27
    %s83 = ssub.s32 %s16, %s23
    %s84 = sor.u32 %s82, %s83
    %p85 = scmp.eq.s32.totalorder %s84, 0
    %s87 = sadd.s32 %s86, 1
    %s88 = scalar_select %p85, %s86, %s87
    %p91 = pneg %p85
    %p92 = scmp.eq.s32.totalorder %s8, 1
    %p93 = por %p91, %p92
    %p94 = scmp.ne.s32.totalorder %s86, %s89
    %p95 = scmp.eq.s32.totalorder %s8, 0
    %p96 = por %p94, %p95
    %p97 = scmp.ne.s32.totalorder %s86, %s89
    %p98 = scmp.eq.s32.totalorder %s13, 1
    %p99 = por %p97, %p98
    %p100 = scmp.ne.s32.totalorder %s89, %s90
    %p101 = scmp.eq.s32.totalorder %s13, 0
    %p102 = por %p100, %p101
    %p103 = scmp.ne.s32.totalorder %s89, %s90
    %p104 = scmp.eq.s32.totalorder %s14, 1
    %p105 = por %p103, %p104
    %p107 = scmp.ne.s32.totalorder %s90, %s106
    %p108 = scmp.eq.s32.totalorder %s14, 0
    %p109 = por %p107, %p108
    %p110 = scmp.le.s32.totalorder 1, %s8
    %p111 = scmp.lt.s32.totalorder %s8, 3
    %p112 = pnand %p110, %p111
    %p113 = pneg %p112
    // Predicated region
    $region9: #{glore_forward.3} parent=5 // pred_check
      _
    $region10: #{glore_forward.3} parent=5 // pred_check_branch
      %115 = sbr.rel (%p112) target = $region12
    $region11: #{glore_forward.3} parent=5 // pred_region
      %s116 = ssub.s32 %s8, 1
    $region12: #{glore_forward.3} parent=5 // pred_fallthru
      _
    %p117 = scmp.lt.s32.totalorder %s8, 2
    // Predicated region
    $region13: #{glore_forward.3} parent=5 // pred_check
      %p118 = pneg %p117
    $region14: #{glore_forward.3} parent=5 // pred_check_branch
      %120 = sbr.rel (%p118) target = $region16
    $region15: #{glore_forward.3} parent=5 // pred_region
      // Predicated region
      $region17: #{glore_forward.3} parent=15 // pred_check
        %p121 = pneg %p40
      $region18: #{glore_forward.3} parent=15 // pred_check_branch
        %123 = sbr.rel (%p121) target = $region20
      $region19: #{glore_forward.3} parent=15 // pred_region
        %p124 = scmp.lt.s32.totalorder %s15, 1
        %s125 = scalar_select %p124, %s15, 1
        %s126 = smul.addr %s125, 4
        %s127 = smul.addr %s126, 4
        %s128 = scalar_lea.vmem %s0, %s127
      $region20: #{glore_forward.3} parent=15 // pred_fallthru
        _
      // Predicated region
      $region21: #{glore_forward.3} parent=15 // pred_check
        %p129 = pneg %p68
      $region22: #{glore_forward.3} parent=15 // pred_check_branch
        %131 = sbr.rel (%p129) target = $region24
      $region23: #{glore_forward.3} parent=15 // pred_region
        %s132 = smul.u32 2, %s16
        %p133 = scmp.lt.s32.totalorder %s15, 1
        %s134 = scalar_select %p133, %s15, 1
        %p135 = scmp.lt.s32.totalorder %s132, 1
        %s136 = scalar_select %p135, %s132, 1
        %s137 = smul.addr %s134, 8
        %s138 = sadd.s32 %s136, %s137
        %s139 = smul.addr %s138, 8
        %s140 = scalar_lea.vmem %s1, %s139
        %s141 = smul.u32 2, %s16
      $region24: #{glore_forward.3} parent=15 // pred_fallthru
        _
    $region16: #{glore_forward.3} parent=5 // pred_fallthru
      _
    %p142 = scmp.le.s32.totalorder 1, %s8
    %p143 = scmp.lt.s32.totalorder %s8, 3
    %p144 = pnand %p142, %p143
    %p145 = pneg %p144
    // Predicated region
    $region25: #{glore_forward.3} parent=5 // pred_check
      _
    $region26: #{glore_forward.3} parent=5 // pred_check_branch
      %147 = sbr.rel (%p144) target = $region28
    $region27: #{glore_forward.3} parent=5 // pred_region
      %s148 = ssub.s32 %s8, 1
      %p149 = scmp.lt.s32.totalorder %s17, 1
      %s150 = scalar_select %p149, %s17, 1
      %s151 = smul.addr %s150, 4
      %s152 = smul.addr %s151, 4
      %s153 = scalar_lea.vmem %s0, %s152
      %p154 = pneg %p46
      %p155 = pneg %p43
      %s156 = smul.u32 2, %s18
      %p157 = scmp.lt.s32.totalorder %s17, 1
      %s158 = scalar_select %p157, %s17, 1
      %p159 = scmp.lt.s32.totalorder %s156, 1
      %s160 = scalar_select %p159, %s156, 1
      %s161 = smul.addr %s158, 8
      %s162 = sadd.s32 %s160, %s161
      %s163 = smul.addr %s162, 8
      %s164 = scalar_lea.vmem %s1, %s163
      %p165 = pneg %p74
      %p166 = pneg %p71
      %p167 = pneg %p102
      %p168 = pneg %p99
      %s169 = smul.u32 2, %s18
      %p170 = scmp.lt.s32.totalorder %s17, 1
      %s171 = scalar_select %p170, %s17, 1
      %p172 = scmp.lt.s32.totalorder %s169, 1
      %s173 = scalar_select %p172, %s169, 1
      %s174 = smul.addr %s171, 8
      %s175 = sadd.s32 %s173, %s174
      %s176 = smul.addr %s175, 8
      %s177 = scalar_lea.vmem %s2, %s176
      %p178 = scmp.lt.s32.totalorder %s17, 1
      %s179 = scalar_select %p178, %s17, 1
      %s180 = smul.addr %s179, 4
      %s181 = smul.addr %s180, 4
      %s182 = scalar_lea.vmem %s0, %s181
      %s183 = smul.u32 2, %s18
      %p184 = scmp.lt.s32.totalorder %s17, 1
      %s185 = scalar_select %p184, %s17, 1
      %p186 = scmp.lt.s32.totalorder %s183, 1
      %s187 = scalar_select %p186, %s183, 1
      %s188 = smul.addr %s185, 8
      %s189 = sadd.s32 %s187, %s188
      %s190 = smul.addr %s189, 8
      %s191 = scalar_lea.vmem %s1, %s190
      %s192 = smul.u32 2, %s18
      %s193 = smul.u32 2, %s18
      %p194 = scmp.lt.s32.totalorder %s17, 1
      %s195 = scalar_select %p194, %s17, 1
      %p196 = scmp.lt.s32.totalorder %s193, 1
      %s197 = scalar_select %p196, %s193, 1
      %s198 = smul.addr %s195, 8
      %s199 = sadd.s32 %s197, %s198
      %s200 = smul.addr %s199, 8
      %s201 = scalar_lea.vmem %s2, %s200
      %s202 = smul.u32 2, %s18
      %v204 = vld [vmem:[%s191] sm:$0xff]
      %v205 = vld [vmem:[%s191 + $0x8] sm:$0xff]
      %v206 = vld [vmem:[%s191 + $0x10] sm:$0xff]
      %v207 = vld [vmem:[%s191 + $0x18] sm:$0xff]
      %v208 = vld [vmem:[%s191 + $0x20] sm:$0xff]
      %v209 = vld [vmem:[%s191 + $0x28] sm:$0xff]
      %v210 = vld [vmem:[%s191 + $0x30] sm:$0xff]
      %v211 = vld [vmem:[%s191 + $0x38] sm:$0xff]
      %v212 = vld [vmem:[%s182] sm:$0xf]
      %v213 = vld [vmem:[%s182 + $0x4] sm:$0xf]
      %v214 = vld [vmem:[%s182 + $0x8] sm:$0xf]
      %v215 = vld [vmem:[%s182 + $0xc] sm:$0xf]
      %v216 = vpack.c.bf16 %v206, %v204
      %v217 = vpack.c.bf16 %v207, %v205
      %v218 = vpack.c.bf16 %v210, %v208
      %v219 = vpack.c.bf16 %v211, %v209
      %v224 = vunpack.c.l.b16 %v212
      %v225 = vunpack.c.l.b16 %v213
      %v226 = vunpack.c.l.b16 %v214
      %v227 = vunpack.c.l.b16 %v215
      %v228 = vpack.c.b16 %v225, %v224
      %v229 = vpack.c.b16 %v227, %v226
      %vm230 = vcmask 261120
      %v232 = vsel %vm230, %v228, 0
      %v235 = vsel %vm230, %v229, 0
      %237 = vmatprep.subr.bf16.mxu0 0
      %238 = vmatpush1.bf16.msra.mxu0 0
      %239 = vmatprep.subr.bf16.mxu0 0
      %240 = vmatpush1.bf16.msra.mxu0 0
      %241 = vmatprep.subr.bf16.mxu0 0
      %242 = vmatpush1.bf16.msra.mxu0 0
      %243 = vmatprep.subr.bf16.mxu0 0
      %244 = vmatpush1.bf16.msra.mxu0 0
      %245 = vmatprep.subr.bf16.mxu0 0
      %246 = vmatpush1.bf16.msra.mxu0 0
      %247 = vmatprep.subr.bf16.mxu0 0
      %248 = vmatpush1.bf16.msra.mxu0 0
      %249 = vmatprep.subr.bf16.mxu0 %v219
      %250 = vmatpush1.bf16.msra.mxu0 %v218
      %251 = vmatprep.subr.bf16.mxu0 %v217
      %252 = vmatpush1.bf16.msra.mxu0 %v216
      %253 = vmatprep.subr.bf16.mxu0 0
      %254 = vmatpush2.bf16.msra.mxu0 0
      %255 = vmatprep.subr.bf16.mxu0 0
      %256 = vmatpush2.bf16.msra.mxu0 0
      %257 = vmatprep.subr.bf16.mxu0 0
      %258 = vmatpush2.bf16.msra.mxu0 0
      %259 = vmatprep.subr.bf16.mxu0 0
      %260 = vmatpush2.bf16.msra.mxu0 0
      %261 = vmatprep.subr.bf16.mxu0 0
      %262 = vmatpush2.bf16.msra.mxu0 0
      %263 = vmatprep.subr.bf16.mxu0 0
      %264 = vmatpush2.bf16.msra.mxu0 0
      %265 = vmatprep.subr.bf16.mxu0 0
      %266 = vmatpush2.bf16.msra.mxu0 0
      %267 = vmatprep.subr.bf16.mxu0 0
      %268 = vmatpush2.bf16.msra.mxu0 0
      %269 = vmatprep.mubr.bf16.mxu0 0
      %270 = vmatmul.mubr.bf16.gmra.mxu0 %v232
      %v271 = vpop.f32.mrf.mxu0
      %v272 = vadd.f32 0.0, %v271
      %v273 = vpop.f32.mrf.mxu0
      %v274 = vadd.f32 0.0, %v273
      %v275 = vpop.f32.mrf.mxu0
      %v276 = vadd.f32 0.0, %v275
      %v277 = vpop.f32.mrf.mxu0
      %v278 = vadd.f32 0.0, %v277
      %279 = vmatprep.mubr.bf16.mxu0 0
      %280 = vmatmul.mubr.bf16.gmra.mxu0 %v235
      %v281 = vpop.f32.mrf.mxu0
      %v282 = vadd.f32 0.0, %v281
      %v283 = vpop.f32.mrf.mxu0
      %v284 = vadd.f32 0.0, %v283
      %v285 = vpop.f32.mrf.mxu0
      %v286 = vadd.f32 0.0, %v285
      %v287 = vpop.f32.mrf.mxu0
      %v288 = vadd.f32 0.0, %v287
      %289 = vdwg.mxu0
      %v290 = vadd.f32 %v204, %v272
      %v291 = vadd.f32 %v205, %v274
      %v292 = vadd.f32 %v206, %v276
      %v293 = vadd.f32 %v207, %v278
      %v294 = vadd.f32 %v208, %v282
      %v295 = vadd.f32 %v209, %v284
      %v296 = vadd.f32 %v210, %v286
      %v297 = vadd.f32 %v211, %v288
      %298 = vst [vmem:[%s201] sm:$0xff] %v290
      %299 = vst [vmem:[%s201 + $0x8] sm:$0xff] %v291
      %300 = vst [vmem:[%s201 + $0x10] sm:$0xff] %v292
      %301 = vst [vmem:[%s201 + $0x18] sm:$0xff] %v293
      %302 = vst [vmem:[%s201 + $0x20] sm:$0xff] %v294
      %303 = vst [vmem:[%s201 + $0x28] sm:$0xff] %v295
      %304 = vst [vmem:[%s201 + $0x30] sm:$0xff] %v296
      %305 = vst [vmem:[%s201 + $0x38] sm:$0xff] %v297
      %s306 = smul.u32 2, %s18
      %p307 = scmp.lt.s32.totalorder %s17, 1
      %s308 = scalar_select %p307, %s17, 1
      %p309 = scmp.lt.s32.totalorder %s306, 1
      %s310 = scalar_select %p309, %s306, 1
      %s311 = smul.addr %s308, 8
      %s312 = sadd.s32 %s310, %s311
      %s313 = smul.addr %s312, 8
      %s314 = scalar_lea.vmem %s2, %s313
      // Predicated region
      $region29: #{glore_forward.3} parent=27 // pred_check
        %p315 = pneg %p99
      $region30: #{glore_forward.3} parent=27 // pred_check_branch
        %317 = sbr.rel (%p315) target = $region32
      $region31: #{glore_forward.3} parent=27 // pred_region
        %s318 = smul.u32 2, %s18
      $region32: #{glore_forward.3} parent=27 // pred_fallthru
        _
    $region28: #{glore_forward.3} parent=5 // pred_fallthru
      _
    %p319 = scmp.le.s32.totalorder 2, %s8
    // Predicated region
    $region33: #{glore_forward.3} parent=5 // pred_check
      %p320 = pneg %p319
    $region34: #{glore_forward.3} parent=5 // pred_check_branch
      %322 = sbr.rel (%p320) target = $region36
    $region35: #{glore_forward.3} parent=5 // pred_region
      %s323 = ssub.s32 %s8, 2
      // Predicated region
      $region37: #{glore_forward.3} parent=35 // pred_check
        %p324 = pneg %p105
      $region38: #{glore_forward.3} parent=35 // pred_check_branch
        %326 = sbr.rel (%p324) target = $region40
      $region39: #{glore_forward.3} parent=35 // pred_region
        %s327 = smul.u32 2, %s20
        %p328 = scmp.lt.s32.totalorder %s19, 1
        %s329 = scalar_select %p328, %s19, 1
        %p330 = scmp.lt.s32.totalorder %s327, 1
        %s331 = scalar_select %p330, %s327, 1
        %s332 = smul.addr %s329, 8
        %s333 = sadd.s32 %s331, %s332
        %s334 = smul.addr %s333, 8
        %s335 = scalar_lea.vmem %s2, %s334
      $region40: #{glore_forward.3} parent=35 // pred_fallthru
        _
    $region36: #{glore_forward.3} parent=5 // pred_fallthru
      _
  $region6: #{glore_forward.3} parent=0 // loop_footer
    %s12 = sadd.s32 1, %s8
  $region7: #{glore_forward.3} parent=0 // loop_footer_branch
    %7 = sbr.rel target = $region3
  $region8: #{glore_forward.3} parent=0 // loop_exit
    _

</llo_original>
